<compile_context>
chip_gen: v7x
topology: tpu7x:2x2x1
jax: 0.10.0
libtpu: 0.0.40
codegen_flags: <defaults>
</compile_context>

<pallas_src>
import functools

import jax
import jax.numpy as jnp
from jax.experimental import pallas as pl
from jax.experimental.pallas import tpu as pltpu


def _round_up(n, m):
    return ((n + m - 1) // m) * m


def _vmem_capacity_bytes():
    """Per-core VMEM capacity; conservative fallback if query unavailable."""
    try:
        info = pltpu.get_tpu_info()
        cap = getattr(info, "vmem_capacity_bytes", None)
        if cap:
            return int(cap)
    except Exception:
        pass
    return 64 * 1024 * 1024  # v7x per-TC VMEM (smallest of current gens)


def _resident_spec(shape):
    """Whole-array block, constant index_map, single-buffered (no re-DMA)."""
    idx = lambda i: (0, 0)
    try:
        return pl.BlockSpec(shape, idx, pipeline_mode=pl.Buffered(1))
    except TypeError:
        # Older pl.BlockSpec without pipeline_mode: fall back to default buffering.
        return pl.BlockSpec(shape, idx)


def resnet_block_kernel(x_ref, w1s_ref, b1s_ref, w2_ref, b2_ref,
                        w3_ref, b3_ref, o_ref, *, h_pad):
    """One batch tile. Matmuls run bf16 x bf16 -> f32 on the MXU; bias add +
    ReLU stay f32 on the VPU."""
    x = x_ref[...]                                    # (TILE_B, in_pad)  bf16

    # Fused first layer + shortcut:  x @ [W1 | Ws]  (shared LHS, shared K).
    h1s = jnp.dot(x, w1s_ref[...], preferred_element_type=jnp.float32)
    h1s = jnp.maximum(h1s + b1s_ref[...], 0.0)        # (TILE_B, h_pad + fc_pad)

    # Split at a 128-aligned lane boundary (static slice).
    h1 = h1s[:, :h_pad].astype(x.dtype)               # main branch -> bf16
    sc = h1s[:, h_pad:]                               # shortcut branch, f32

    h2 = jnp.dot(h1, w2_ref[...], preferred_element_type=jnp.float32)
    h2 = jnp.maximum(h2 + b2_ref[...], 0.0).astype(x.dtype)

    h3 = jnp.dot(h2, w3_ref[...], preferred_element_type=jnp.float32)
    h3 = jnp.maximum(h3 + b3_ref[...], 0.0)

    o_ref[...] = (h3 + sc).astype(o_ref.dtype)


def prepare_params(params, *, compute_dtype=jnp.bfloat16):
    """One-time weight packing: pad to lane-dense (x128) shapes, fuse W1|Ws,
    cast matmul operands to compute_dtype (biases stay f32). Call once; reuse
    the packed dict across forward calls."""
    input_dim = params["w1"].shape[0]
    h = params["w1"].shape[1]                 # fc_dim // 2
    fc_dim = params["w3"].shape[1]

    in_pad = _round_up(input_dim, 128)
    h_pad = _round_up(h, 128)
    fc_pad = _round_up(fc_dim, 128)

    def pad2(a, rows, cols):
        return jnp.pad(a, ((0, rows - a.shape[0]), (0, cols - a.shape[1])))

    packed = dict(
        w1s=jnp.concatenate(
            [pad2(params["w1"], in_pad, h_pad),
             pad2(params["ws"], in_pad, fc_pad)], axis=1).astype(compute_dtype),
        b1s=jnp.concatenate(
            [pad2(params["b1"], 1, h_pad),
             pad2(params["bs"], 1, fc_pad)], axis=1).astype(jnp.float32),
        w2=pad2(params["w2"], h_pad, h_pad).astype(compute_dtype),
        b2=pad2(params["b2"], 1, h_pad).astype(jnp.float32),
        w3=pad2(params["w3"], h_pad, fc_pad).astype(compute_dtype),
        b3=pad2(params["b3"], 1, fc_pad).astype(jnp.float32),
    )
    meta = dict(input_dim=input_dim, fc_dim=fc_dim,
                in_pad=in_pad, h_pad=h_pad, fc_pad=fc_pad,
                compute_dtype=compute_dtype)
    return packed, meta


def resnet_block(x, packed, *, meta, out_dtype=None, max_tile_b=1024):
    """x: (B, input_dim) float32. packed/meta: from prepare_params()."""
    B, input_dim = x.shape
    assert input_dim == meta["input_dim"]
    compute_dtype = meta["compute_dtype"]
    out_dtype = compute_dtype if out_dtype is None else out_dtype
    in_pad, h_pad, fc_pad = meta["in_pad"], meta["h_pad"], meta["fc_pad"]
    fc_dim = meta["fc_dim"]

    comp_isize = jnp.dtype(compute_dtype).itemsize
    out_isize = jnp.dtype(out_dtype).itemsize

    # ---- generation-aware VMEM budget -------------------------------------
    vmem_cap = _vmem_capacity_bytes()                 # 128 MiB v5e/v6e, 64 MiB v7x
    vmem_limit = min(int(0.9 * vmem_cap), 100 * 1024 * 1024)
    budget = int(0.85 * vmem_limit)

    # Resident weights/biases: single-buffered (pl.Buffered(1)) -> counted once.
    weight_bytes = ((packed["w1s"].size + packed["w2"].size + packed["w3"].size)
                    * comp_isize
                    + (packed["b1s"].size + packed["b2"].size + packed["b3"].size) * 4)

    def tile_bytes(tb):
        # Streamed tiles (double-buffered by the pipeline).
        stream = 2 * tb * in_pad * comp_isize + 2 * tb * fc_pad * out_isize
        # In-kernel live intermediates (conservative: all counted).
        interm = tb * (h_pad + fc_pad) * 4            # h1s (f32)
        interm += tb * h_pad * comp_isize             # h1 (bf16 copy)
        interm += tb * fc_pad * 4                     # sc (f32 slice copy)
        interm += tb * h_pad * (4 + comp_isize)       # h2 (f32 + bf16)
        interm += tb * fc_pad * 4                     # h3 (f32)
        return stream + interm

    # Batch tile: multiple of 16 (bf16 sublane packing), as large as fits.
    tile_b = min(_round_up(B, 16), max_tile_b)
    while tile_b > 16 and weight_bytes + tile_bytes(tile_b) > budget:
        tile_b -= 16
    if weight_bytes + tile_bytes(tile_b) > budget:
        # TODO(synk): add a second 'parallel' grid axis over fc_pad (stream
        # W3/Ws/b3/bs column tiles, keep W2 resident) instead of failing when
        # fc_dim is too large for v7x's 64 MiB VMEM; optionally fp8 weights.
        raise ValueError(
            "ResNet_Block weights + tiles exceed the VMEM budget "
            f"({weight_bytes + tile_bytes(tile_b)} > {budget} bytes)")

    b_pad = _round_up(B, tile_b)
    x_p = jnp.pad(x, ((0, b_pad - B), (0, in_pad - input_dim))).astype(compute_dtype)

    grid = (b_pad // tile_b,)
    kernel = functools.partial(resnet_block_kernel, h_pad=h_pad)

    # Scheduling hint for XLA around the custom call.
    flops = 2 * b_pad * (in_pad * (h_pad + fc_pad)
                         + h_pad * h_pad + h_pad * fc_pad)
    bytes_accessed = (b_pad * in_pad * comp_isize
                      + weight_bytes
                      + b_pad * fc_pad * out_isize)
    cost = pl.CostEstimate(flops=flops, transcendentals=0,
                           bytes_accessed=bytes_accessed)

    out = pl.pallas_call(
        kernel,
        out_shape=jax.ShapeDtypeStruct((b_pad, fc_pad), out_dtype),
        grid=grid,
        in_specs=[
            pl.BlockSpec((tile_b, in_pad), lambda i: (i, 0)),  # x: batch-tiled
            _resident_spec(packed["w1s"].shape),               # weights resident,
            _resident_spec(packed["b1s"].shape),               # single-buffered
            _resident_spec(packed["w2"].shape),
            _resident_spec(packed["b2"].shape),
            _resident_spec(packed["w3"].shape),
            _resident_spec(packed["b3"].shape),
        ],
        out_specs=pl.BlockSpec((tile_b, fc_pad), lambda i: (i, 0)),
        compiler_params=pltpu.CompilerParams(
            dimension_semantics=("parallel",),   # megacore sharding on v7x
            vmem_limit_bytes=vmem_limit,
        ),
        cost_estimate=cost,
    )(x_p, packed["w1s"], packed["b1s"], packed["w2"], packed["b2"],
      packed["w3"], packed["b3"])

    return out[:B, :fc_dim]


def init_params(key, input_dim, fc_dim):
    """Deterministic init mimicking nn.Linear shapes; stored as (in, out)."""
    h = fc_dim // 2
    ks = jax.random.split(key, 8)

    def lin(kw, kb, fan_in, fan_out):
        bound = 1.0 / jnp.sqrt(fan_in)
        w = jax.random.uniform(kw, (fan_in, fan_out), jnp.float32, -bound, bound)
        b = jax.random.uniform(kb, (1, fan_out), jnp.float32, -bound, bound)
        return w, b

    w1, b1 = lin(ks[0], ks[1], input_dim, h)
    w2, b2 = lin(ks[2], ks[3], h, h)
    w3, b3 = lin(ks[4], ks[5], h, fc_dim)
    ws, bs = lin(ks[6], ks[7], input_dim, fc_dim)
    return dict(w1=w1, b1=b1, w2=w2, b2=b2, w3=w3, b3=b3, ws=ws, bs=bs)


def reference(x, p):
    relu = lambda v: jnp.maximum(v, 0.0)
    h = relu(x @ p["w1"] + p["b1"])
    h = relu(h @ p["w2"] + p["b2"])
    h = relu(h @ p["w3"] + p["b3"])
    return h + relu(x @ p["ws"] + p["bs"])


if __name__ == "__main__":
    # afn='relu', nfn != 'layer_norm' (the only path the PyTorch module allows).
    B, input_dim, fc_dim = 8, 32, 64

    key = jax.random.PRNGKey(0)
    kx, kp = jax.random.split(key)
    x = jax.random.normal(kx, (B, input_dim), jnp.float32)
    params = init_params(kp, input_dim, fc_dim)

    # One-time weight packing (hoisted out of the forward pass).
    packed, meta = prepare_params(params, compute_dtype=jnp.bfloat16)
    packed = jax.tree_util.tree_map(jax.block_until_ready, packed)

    fwd = jax.jit(functools.partial(resnet_block, meta=meta))
    out = jax.block_until_ready(fwd(x, packed))

    ref = reference(x, params)
    assert out.shape == (B, fc_dim)
    out_f32 = out.astype(jnp.float32)
    # bf16 operands + bf16 output (f32 accumulation) -> relaxed tolerance.
    assert jnp.allclose(out_f32, ref, atol=5e-2, rtol=5e-2), (
        float(jnp.max(jnp.abs(out_f32 - ref))))
    print("KERNEL_OK")
</pallas_src>

<mosaic_0001>
module attributes {stable_mosaic.version = 11 : i64} {
  func.func @resnet_block_kernel(%arg0: i32, %arg1: memref<16x128xbf16, #tpu.memory_space<vmem>>, %arg2: memref<128x256xbf16, #tpu.memory_space<vmem>>, %arg3: memref<1x256xf32, #tpu.memory_space<vmem>>, %arg4: memref<128x128xbf16, #tpu.memory_space<vmem>>, %arg5: memref<1x128xf32, #tpu.memory_space<vmem>>, %arg6: memref<128x128xbf16, #tpu.memory_space<vmem>>, %arg7: memref<1x128xf32, #tpu.memory_space<vmem>>, %arg8: memref<16x128xbf16, #tpu.memory_space<vmem>>) attributes {dimension_semantics = [#tpu.dimension_semantics<parallel>], iteration_bounds = array<i64: 1>, scalar_prefetch = 0 : i64, scratch_operands = 0 : i64, tpu.core_type = #tpu.core_type<tc>, window_params = [{transform_indices = @transform_0, window_bounds = array<i64: 16, 128>}, {pipeline_mode = #tpu.pipeline_mode<synchronous>, transform_indices = @transform_1, window_bounds = array<i64: 128, 256>}, {pipeline_mode = #tpu.pipeline_mode<synchronous>, transform_indices = @transform_2, window_bounds = array<i64: 1, 256>}, {pipeline_mode = #tpu.pipeline_mode<synchronous>, transform_indices = @transform_3, window_bounds = array<i64: 128, 128>}, {pipeline_mode = #tpu.pipeline_mode<synchronous>, transform_indices = @transform_4, window_bounds = array<i64: 1, 128>}, {pipeline_mode = #tpu.pipeline_mode<synchronous>, transform_indices = @transform_5, window_bounds = array<i64: 128, 128>}, {pipeline_mode = #tpu.pipeline_mode<synchronous>, transform_indices = @transform_6, window_bounds = array<i64: 1, 128>}, {transform_indices = @transform_7, window_bounds = array<i64: 16, 128>}]} {
    %c0 = arith.constant 0 : index
    %c0_0 = arith.constant 0 : index
    %0 = vector.load %arg1[%c0, %c0_0] : memref<16x128xbf16, #tpu.memory_space<vmem>>, vector<16x128xbf16>
    %c0_1 = arith.constant 0 : index
    %c0_2 = arith.constant 0 : index
    %1 = vector.load %arg2[%c0_1, %c0_2] : memref<128x256xbf16, #tpu.memory_space<vmem>>, vector<128x256xbf16>
    %cst = arith.constant dense<0.000000e+00> : vector<16x256xf32>
    %2 = tpu.matmul %0, %1, %cst {dimension_numbers = #tpu.dot_dimension_numbers<[1], [0], [0], [1], [0, 0, 1, 1], [], []>} : vector<16x128xbf16>, vector<128x256xbf16>, vector<16x256xf32> -> vector<16x256xf32>
    %c0_3 = arith.constant 0 : index
    %c0_4 = arith.constant 0 : index
    %3 = vector.load %arg3[%c0_3, %c0_4] : memref<1x256xf32, #tpu.memory_space<vmem>>, vector<1x256xf32>
    %4 = vector.broadcast %3 : vector<1x256xf32> to vector<16x256xf32>
    %5 = arith.addf %2, %4 : vector<16x256xf32>
    %cst_5 = arith.constant 0.000000e+00 : f32
    %6 = vector.broadcast %cst_5 : f32 to vector<16x256xf32>
    %7 = arith.maximumf %5, %6 : vector<16x256xf32>
    %8 = vector.extract_strided_slice %7 {offsets = [0, 0], sizes = [16, 128], strides = [1, 1]} : vector<16x256xf32> to vector<16x128xf32>
    %9 = arith.truncf %8 : vector<16x128xf32> to vector<16x128xbf16>
    %10 = vector.extract_strided_slice %7 {offsets = [0, 128], sizes = [16, 128], strides = [1, 1]} : vector<16x256xf32> to vector<16x128xf32>
    %c0_6 = arith.constant 0 : index
    %c0_7 = arith.constant 0 : index
    %11 = vector.load %arg4[%c0_6, %c0_7] : memref<128x128xbf16, #tpu.memory_space<vmem>>, vector<128x128xbf16>
    %cst_8 = arith.constant dense<0.000000e+00> : vector<16x128xf32>
    %12 = tpu.matmul %9, %11, %cst_8 {dimension_numbers = #tpu.dot_dimension_numbers<[1], [0], [0], [1], [0, 0, 1, 1], [], []>} : vector<16x128xbf16>, vector<128x128xbf16>, vector<16x128xf32> -> vector<16x128xf32>
    %c0_9 = arith.constant 0 : index
    %c0_10 = arith.constant 0 : index
    %13 = vector.load %arg5[%c0_9, %c0_10] : memref<1x128xf32, #tpu.memory_space<vmem>>, vector<1x128xf32>
    %14 = vector.broadcast %13 : vector<1x128xf32> to vector<16x128xf32>
    %15 = arith.addf %12, %14 : vector<16x128xf32>
    %cst_11 = arith.constant 0.000000e+00 : f32
    %16 = vector.broadcast %cst_11 : f32 to vector<16x128xf32>
    %17 = arith.maximumf %15, %16 : vector<16x128xf32>
    %18 = arith.truncf %17 : vector<16x128xf32> to vector<16x128xbf16>
    %c0_12 = arith.constant 0 : index
    %c0_13 = arith.constant 0 : index
    %19 = vector.load %arg6[%c0_12, %c0_13] : memref<128x128xbf16, #tpu.memory_space<vmem>>, vector<128x128xbf16>
    %cst_14 = arith.constant dense<0.000000e+00> : vector<16x128xf32>
    %20 = tpu.matmul %18, %19, %cst_14 {dimension_numbers = #tpu.dot_dimension_numbers<[1], [0], [0], [1], [0, 0, 1, 1], [], []>} : vector<16x128xbf16>, vector<128x128xbf16>, vector<16x128xf32> -> vector<16x128xf32>
    %c0_15 = arith.constant 0 : index
    %c0_16 = arith.constant 0 : index
    %21 = vector.load %arg7[%c0_15, %c0_16] : memref<1x128xf32, #tpu.memory_space<vmem>>, vector<1x128xf32>
    %22 = vector.broadcast %21 : vector<1x128xf32> to vector<16x128xf32>
    %23 = arith.addf %20, %22 : vector<16x128xf32>
    %cst_17 = arith.constant 0.000000e+00 : f32
    %24 = vector.broadcast %cst_17 : f32 to vector<16x128xf32>
    %25 = arith.maximumf %23, %24 : vector<16x128xf32>
    %26 = arith.addf %25, %10 : vector<16x128xf32>
    %27 = arith.truncf %26 : vector<16x128xf32> to vector<16x128xbf16>
    %c0_18 = arith.constant 0 : index
    %c0_19 = arith.constant 0 : index
    %28 = vector.load %arg8[%c0_18, %c0_19] : memref<16x128xbf16, #tpu.memory_space<vmem>>, vector<16x128xbf16>
    tpu.vector_store %arg8[%c0_18, %c0_19], %27 {strides = array<i32>} : memref<16x128xbf16, #tpu.memory_space<vmem>>, vector<16x128xbf16>,
    return
  }
  func.func @transform_0(%arg0: i32) -> (i32, i32) {
    %c0_i32 = arith.constant 0 : i32
    %c0_i32_0 = arith.constant 0 : i32
    return %arg0, %c0_i32 : i32, i32
  }
  func.func @transform_1(%arg0: i32) -> (i32, i32) {
    %c0_i32 = arith.constant 0 : i32
    %c0_i32_0 = arith.constant 0 : i32
    %c0_i32_1 = arith.constant 0 : i32
    return %c0_i32, %c0_i32_0 : i32, i32
  }
  func.func @transform_2(%arg0: i32) -> (i32, i32) {
    %c0_i32 = arith.constant 0 : i32
    %c0_i32_0 = arith.constant 0 : i32
    %c0_i32_1 = arith.constant 0 : i32
    return %c0_i32, %c0_i32_0 : i32, i32
  }
  func.func @transform_3(%arg0: i32) -> (i32, i32) {
    %c0_i32 = arith.constant 0 : i32
    %c0_i32_0 = arith.constant 0 : i32
    %c0_i32_1 = arith.constant 0 : i32
    return %c0_i32, %c0_i32_0 : i32, i32
  }
  func.func @transform_4(%arg0: i32) -> (i32, i32) {
    %c0_i32 = arith.constant 0 : i32
    %c0_i32_0 = arith.constant 0 : i32
    %c0_i32_1 = arith.constant 0 : i32
    return %c0_i32, %c0_i32_0 : i32, i32
  }
  func.func @transform_5(%arg0: i32) -> (i32, i32) {
    %c0_i32 = arith.constant 0 : i32
    %c0_i32_0 = arith.constant 0 : i32
    %c0_i32_1 = arith.constant 0 : i32
    return %c0_i32, %c0_i32_0 : i32, i32
  }
  func.func @transform_6(%arg0: i32) -> (i32, i32) {
    %c0_i32 = arith.constant 0 : i32
    %c0_i32_0 = arith.constant 0 : i32
    %c0_i32_1 = arith.constant 0 : i32
    return %c0_i32, %c0_i32_0 : i32, i32
  }
  func.func @transform_7(%arg0: i32) -> (i32, i32) {
    %c0_i32 = arith.constant 0 : i32
    %c0_i32_0 = arith.constant 0 : i32
    return %arg0, %c0_i32 : i32, i32
  }
}

</mosaic_0001>

<llo_original>
// kernel: resnet_block.1
$region0: #{resnet_block.1}
  #allocation0 [shape = 'u32[]', space=smem, size = 0x4, offset = 0x4, fixed_abs, tag = 'smem constant byte address 0x4 - core index']
  #allocation1 [shape = 'u32[144,128]{1,0:T(1,128)}', space=vmem, size = 0x12000, scoped, tag = 'internal scratch']
  %s0 = inlined_call_operand.vmem [shape: bf16[16,128], index: 0, kind: input, shape index: {}]
  %s1 = inlined_call_operand.hbm [shape: bf16[128,256], index: 1, kind: input, shape index: {}]
  %s2 = inlined_call_operand.vmem [shape: f32[1,256], index: 2, kind: input, shape index: {}]
  %s3 = inlined_call_operand.hbm [shape: bf16[128,128], index: 3, kind: input, shape index: {}]
  %s4 = inlined_call_operand.vmem [shape: f32[1,128], index: 4, kind: input, shape index: {}]
  %s5 = inlined_call_operand.hbm [shape: bf16[128,128], index: 5, kind: input, shape index: {}]
  %s6 = inlined_call_operand.vmem [shape: f32[1,128], index: 6, kind: input, shape index: {}]
  %s7 = inlined_call_operand.vmem [shape: bf16[16,128], index: 7, kind: output, shape index: {}]
  %s8 = sld [smem:[#allocation0]]
  $region50: #{resnet_block.1} parent=0
    _
  %s10 = ssub.s32 1, %s8
  %s11 = scalar_select 0, %s10, %s8
  $region1: #{resnet_block.1} parent=0
    #allocation2 [shape = 'u8[65536]{0}', space=vmem, size = 0x10000, scoped, tag = 'input window, operand 1, single buffered']
    #allocation3 [shape = 's32[1]{0}', space=sflag, size = 0x4, scoped, tag = 'scoped memory for resnet_block.1']
    #allocation4 [shape = 'u8[32768]{0}', space=vmem, size = 0x8000, scoped, tag = 'input window, operand 3, single buffered']
    #allocation5 [shape = 's32[1]{0}', space=sflag, size = 0x4, scoped, tag = 'scoped memory for resnet_block.1']
    #allocation6 [shape = 'u8[32768]{0}', space=vmem, size = 0x8000, scoped, tag = 'input window, operand 5, single buffered']
    %12 = vsyncpa [#allocation3], 0
    %13 = vsyncpa [#allocation5], 0
    // Predicated region
    $region2: #{resnet_block.1} parent=1 // pred_check
      _
    $region3: #{resnet_block.1} parent=1 // pred_check_branch
      %15 = sbr.rel (0) target = $region5
    $region4: #{resnet_block.1} parent=1 // pred_region
      _
    $region5: #{resnet_block.1} parent=1 // pred_fallthru
      _
    // Predicated region
    $region6: #{resnet_block.1} parent=1 // pred_check
      _
    $region7: #{resnet_block.1} parent=1 // pred_check_branch
      %17 = sbr.rel (0) target = $region9
    $region8: #{resnet_block.1} parent=1 // pred_region
      %s19 = ssub.s32 2048, 2048
      %20 = vsyncadd [#allocation3], %s19
      %s21 = sshll.u32 [#allocation2], 4
      %s22 = int_to_ptr.vmem [resolvable:$true] %s21
      %27 = dma.hbm_to_vmem [thread:$0]  %s1, 2048, %s22, [#allocation3], 128, 128, 8
    $region9: #{resnet_block.1} parent=1 // pred_fallthru
      _
    // Predicated region
    $region10: #{resnet_block.1} parent=1 // pred_check
      _
    $region11: #{resnet_block.1} parent=1 // pred_check_branch
      %29 = sbr.rel (0) target = $region13
    $region12: #{resnet_block.1} parent=1 // pred_region
      _
    $region13: #{resnet_block.1} parent=1 // pred_fallthru
      _
    // Predicated region
    $region14: #{resnet_block.1} parent=1 // pred_check
      _
    $region15: #{resnet_block.1} parent=1 // pred_check_branch
      %31 = sbr.rel (0) target = $region17
    $region16: #{resnet_block.1} parent=1 // pred_region
      %s33 = ssub.s32 1024, 1024
      %34 = vsyncadd [#allocation5], %s33
      %s35 = sshll.u32 [#allocation4], 4
      %s36 = int_to_ptr.vmem [resolvable:$true] %s35
      %41 = dma.hbm_to_vmem [thread:$0]  %s3, 1024, %s36, [#allocation5], 64, 64, 4
    $region17: #{resnet_block.1} parent=1 // pred_fallthru
      _
    // Predicated region
    $region18: #{resnet_block.1} parent=1 // pred_check
      _
    $region19: #{resnet_block.1} parent=1 // pred_check_branch
      %43 = sbr.rel (0) target = $region21
    $region20: #{resnet_block.1} parent=1 // pred_region
      _
    $region21: #{resnet_block.1} parent=1 // pred_fallthru
      _
    // Predicated region
    $region22: #{resnet_block.1} parent=1 // pred_check
      _
    $region23: #{resnet_block.1} parent=1 // pred_check_branch
      %45 = sbr.rel (0) target = $region25
    $region24: #{resnet_block.1} parent=1 // pred_region
      %s47 = ssub.s32 1024, 1024
      %48 = vsyncadd [#allocation5], %s47
      %s49 = sshll.u32 [#allocation6], 4
      %s50 = int_to_ptr.vmem [resolvable:$true] %s49
      %55 = dma.hbm_to_vmem [thread:$0]  %s5, 1024, %s50, [#allocation5], 64, 64, 4
    $region25: #{resnet_block.1} parent=1 // pred_fallthru
      _
    // Predicated region
    $region26: #{resnet_block.1} parent=1 // pred_check
      _
    $region27: #{resnet_block.1} parent=1 // pred_check_branch
      %57 = sbr.rel (0) target = $region29
    $region28: #{resnet_block.1} parent=1 // pred_region
      _
    $region29: #{resnet_block.1} parent=1 // pred_fallthru
      _
    // Predicated region
    $region30: #{resnet_block.1} parent=1 // pred_check
      _
    $region31: #{resnet_block.1} parent=1 // pred_check_branch
      %59 = sbr.rel (0) target = $region33
    $region32: #{resnet_block.1} parent=1 // pred_region
      %60 = dma.done [#allocation3], 2048
    $region33: #{resnet_block.1} parent=1 // pred_fallthru
      _
    // Predicated region
    $region34: #{resnet_block.1} parent=1 // pred_check
      _
    $region35: #{resnet_block.1} parent=1 // pred_check_branch
      %62 = sbr.rel (0) target = $region37
    $region36: #{resnet_block.1} parent=1 // pred_region
      %63 = dma.done [#allocation5], 1024
    $region37: #{resnet_block.1} parent=1 // pred_fallthru
      _
    // Predicated region
    $region38: #{resnet_block.1} parent=1 // pred_check
      _
    $region39: #{resnet_block.1} parent=1 // pred_check_branch
      %65 = sbr.rel (0) target = $region41
    $region40: #{resnet_block.1} parent=1 // pred_region
      %66 = dma.done [#allocation5], 1024
    $region41: #{resnet_block.1} parent=1 // pred_fallthru
      _
    %v68 = vld [vmem:[%s0] sm:$0xf]
    %v69 = vld [vmem:[%s0 + $0x4] sm:$0xf]
    %v70 = vld [vmem:[#allocation2] sm:$0xff]
    %v71 = vld [vmem:[#allocation2 + $0x8] sm:$0xff]
    %v72 = vld [vmem:[#allocation2 + $0x10] sm:$0xff]
    %v73 = vld [vmem:[#allocation2 + $0x18] sm:$0xff]
    %v74 = vld [vmem:[#allocation2 + $0x20] sm:$0xff]
    %v75 = vld [vmem:[#allocation2 + $0x28] sm:$0xff]
    %v76 = vld [vmem:[#allocation2 + $0x30] sm:$0xff]
    %v77 = vld [vmem:[#allocation2 + $0x38] sm:$0xff]
    %v78 = vld [vmem:[#allocation2 + $0x40] sm:$0xff]
    %v79 = vld [vmem:[#allocation2 + $0x48] sm:$0xff]
    %v80 = vld [vmem:[#allocation2 + $0x50] sm:$0xff]
    %v81 = vld [vmem:[#allocation2 + $0x58] sm:$0xff]
    %v82 = vld [vmem:[#allocation2 + $0x60] sm:$0xff]
    %v83 = vld [vmem:[#allocation2 + $0x68] sm:$0xff]
    %v84 = vld [vmem:[#allocation2 + $0x70] sm:$0xff]
    %v85 = vld [vmem:[#allocation2 + $0x78] sm:$0xff]
    %v86 = vld [vmem:[%s2] sm:$0x3]
    %v88 = vlaneseq
    %v89 = vshrl.u32 %v88, 7
    %v90 = vsub.s32 0, %v89
    %v91 = vrot.slane %v86, %v90
    %v92 = vlaneseq
    %v93 = vshrl.u32 %v92, 7
    %v94 = vsub.s32 1, %v93
    %v95 = vrot.slane %v86, %v94
    %v100 = vunpack.c.l.b16 %v68
    %v101 = vunpack.c.l.b16 %v69
    %v102 = vpack.c.b16 %v101, %v100
    %v120 = vunpack.c.l.b16 %v70
    %v121 = vunpack.c.h.b16 %v70
    %v122 = vunpack.c.l.b16 %v71
    %v123 = vunpack.c.h.b16 %v71
    %v124 = vunpack.c.l.b16 %v72
    %v125 = vunpack.c.h.b16 %v72
    %v126 = vunpack.c.l.b16 %v73
    %v127 = vunpack.c.h.b16 %v73
    %v128 = vunpack.c.l.b16 %v74
    %v129 = vunpack.c.h.b16 %v74
    %v130 = vunpack.c.l.b16 %v75
    %v131 = vunpack.c.h.b16 %v75
    %v132 = vunpack.c.l.b16 %v76
    %v133 = vunpack.c.h.b16 %v76
    %v134 = vunpack.c.l.b16 %v77
    %v135 = vunpack.c.h.b16 %v77
    %v136 = vunpack.c.l.b16 %v78
    %v137 = vunpack.c.h.b16 %v78
    %v138 = vunpack.c.l.b16 %v79
    %v139 = vunpack.c.h.b16 %v79
    %v140 = vunpack.c.l.b16 %v80
    %v141 = vunpack.c.h.b16 %v80
    %v142 = vunpack.c.l.b16 %v81
    %v143 = vunpack.c.h.b16 %v81
    %v144 = vunpack.c.l.b16 %v82
    %v145 = vunpack.c.h.b16 %v82
    %v146 = vunpack.c.l.b16 %v83
    %v147 = vunpack.c.h.b16 %v83
    %v148 = vunpack.c.l.b16 %v84
    %v149 = vunpack.c.h.b16 %v84
    %v150 = vunpack.c.l.b16 %v85
    %v151 = vunpack.c.h.b16 %v85
    %v152 = vpack.c.b16 %v122, %v120
    %v153 = vpack.c.b16 %v123, %v121
    %v154 = vpack.c.b16 %v126, %v124
    %v155 = vpack.c.b16 %v127, %v125
    %v156 = vpack.c.b16 %v130, %v128
    %v157 = vpack.c.b16 %v131, %v129
    %v158 = vpack.c.b16 %v134, %v132
    %v159 = vpack.c.b16 %v135, %v133
    %v160 = vpack.c.b16 %v138, %v136
    %v161 = vpack.c.b16 %v139, %v137
    %v162 = vpack.c.b16 %v142, %v140
    %v163 = vpack.c.b16 %v143, %v141
    %v164 = vpack.c.b16 %v146, %v144
    %v165 = vpack.c.b16 %v147, %v145
    %v166 = vpack.c.b16 %v150, %v148
    %v167 = vpack.c.b16 %v151, %v149
    %184 = vmatprep.subr.bf16.mxu0 %v153
    %185 = vmatpush1.bf16.msra.mxu0 %v152
    %186 = vmatprep.subr.bf16.mxu0 %v155
    %187 = vmatpush1.bf16.msra.mxu0 %v154
    %188 = vmatprep.subr.bf16.mxu0 %v157
    %189 = vmatpush1.bf16.msra.mxu0 %v156
    %190 = vmatprep.subr.bf16.mxu0 %v159
    %191 = vmatpush1.bf16.msra.mxu0 %v158
    %192 = vmatprep.subr.bf16.mxu0 %v161
    %193 = vmatpush1.bf16.msra.mxu0 %v160
    %194 = vmatprep.subr.bf16.mxu0 %v163
    %195 = vmatpush1.bf16.msra.mxu0 %v162
    %196 = vmatprep.subr.bf16.mxu0 %v165
    %197 = vmatpush1.bf16.msra.mxu0 %v164
    %198 = vmatprep.subr.bf16.mxu0 %v167
    %199 = vmatpush1.bf16.msra.mxu0 %v166
    %200 = vmatprep.subr.bf16.mxu0 0
    %201 = vmatpush1.bf16.msra.mxu0 0
    %202 = vmatprep.subr.bf16.mxu0 0
    %203 = vmatpush1.bf16.msra.mxu0 0
    %204 = vmatprep.subr.bf16.mxu0 0
    %205 = vmatpush1.bf16.msra.mxu0 0
    %206 = vmatprep.subr.bf16.mxu0 0
    %207 = vmatpush1.bf16.msra.mxu0 0
    %208 = vmatprep.subr.bf16.mxu0 0
    %209 = vmatpush1.bf16.msra.mxu0 0
    %210 = vmatprep.subr.bf16.mxu0 0
    %211 = vmatpush1.bf16.msra.mxu0 0
    %212 = vmatprep.subr.bf16.mxu0 0
    %213 = vmatpush1.bf16.msra.mxu0 0
    %214 = vmatprep.subr.bf16.mxu0 0
    %215 = vmatpush1.bf16.msra.mxu0 0
    %216 = vmatprep.mubr.bf16.mxu0 0
    %217 = vmatmul.mubr.bf16.gmra.mrb[0].mxu0 %v102
    %v218 = vpop.f32.mrb[0].mxu0
    %v219 = vadd.f32 %v91, %v218
    %v220 = vpop.f32.mrb[0].mxu0
    %v221 = vadd.f32 %v95, %v220
    %v222 = vpop.f32.mrb[0].mxu0
    %v223 = vadd.f32 %v91, %v222
    %v224 = vpop.f32.mrb[0].mxu0
    %v225 = vadd.f32 %v95, %v224
    %226 = vdwg.mxu0
    %v227 = vmax.f32 %v219, 0.0
    %v228 = vmax.f32 %v221, 0.0
    %v229 = vmax.f32 %v223, 0.0
    %v230 = vmax.f32 %v225, 0.0
    %v231 = vpack.c.bf16 %v229, %v227
    %v232 = vld [vmem:[#allocation4] sm:$0xf]
    %v233 = vld [vmem:[#allocation4 + $0x4] sm:$0xf]
    %v234 = vld [vmem:[#allocation4 + $0x8] sm:$0xf]
    %v235 = vld [vmem:[#allocation4 + $0xc] sm:$0xf]
    %v236 = vld [vmem:[#allocation4 + $0x10] sm:$0xf]
    %v237 = vld [vmem:[#allocation4 + $0x14] sm:$0xf]
    %v238 = vld [vmem:[#allocation4 + $0x18] sm:$0xf]
    %v239 = vld [vmem:[#allocation4 + $0x1c] sm:$0xf]
    %v240 = vld [vmem:[#allocation4 + $0x20] sm:$0xf]
    %v241 = vld [vmem:[#allocation4 + $0x24] sm:$0xf]
    %v242 = vld [vmem:[#allocation4 + $0x28] sm:$0xf]
    %v243 = vld [vmem:[#allocation4 + $0x2c] sm:$0xf]
    %v244 = vld [vmem:[#allocation4 + $0x30] sm:$0xf]
    %v245 = vld [vmem:[#allocation4 + $0x34] sm:$0xf]
    %v246 = vld [vmem:[#allocation4 + $0x38] sm:$0xf]
    %v247 = vld [vmem:[#allocation4 + $0x3c] sm:$0xf]
    %v248 = vld [vmem:[%s4] sm:$0x1]
    %v250 = vlaneseq
    %v251 = vshrl.u32 %v250, 7
    %v252 = vsub.s32 0, %v251
    %v253 = vrot.slane %v248, %v252
    %v271 = vunpack.c.l.b16 %v232
    %v272 = vunpack.c.l.b16 %v233
    %v273 = vunpack.c.l.b16 %v234
    %v274 = vunpack.c.l.b16 %v235
    %v275 = vunpack.c.l.b16 %v236
    %v276 = vunpack.c.l.b16 %v237
    %v277 = vunpack.c.l.b16 %v238
    %v278 = vunpack.c.l.b16 %v239
    %v279 = vunpack.c.l.b16 %v240
    %v280 = vunpack.c.l.b16 %v241
    %v281 = vunpack.c.l.b16 %v242
    %v282 = vunpack.c.l.b16 %v243
    %v283 = vunpack.c.l.b16 %v244
    %v284 = vunpack.c.l.b16 %v245
    %v285 = vunpack.c.l.b16 %v246
    %v286 = vunpack.c.l.b16 %v247
    %v287 = vpack.c.b16 %v272, %v271
    %v288 = vpack.c.b16 %v274, %v273
    %v289 = vpack.c.b16 %v276, %v275
    %v290 = vpack.c.b16 %v278, %v277
    %v291 = vpack.c.b16 %v280, %v279
    %v292 = vpack.c.b16 %v282, %v281
    %v293 = vpack.c.b16 %v284, %v283
    %v294 = vpack.c.b16 %v286, %v285
    %303 = vmatprep.subr.bf16.mxu0 0
    %304 = vmatpush1.bf16.msra.mxu0 %v287
    %305 = vmatprep.subr.bf16.mxu0 0
    %306 = vmatpush1.bf16.msra.mxu0 %v288
    %307 = vmatprep.subr.bf16.mxu0 0
    %308 = vmatpush1.bf16.msra.mxu0 %v289
    %309 = vmatprep.subr.bf16.mxu0 0
    %310 = vmatpush1.bf16.msra.mxu0 %v290
    %311 = vmatprep.subr.bf16.mxu0 0
    %312 = vmatpush1.bf16.msra.mxu0 %v291
    %313 = vmatprep.subr.bf16.mxu0 0
    %314 = vmatpush1.bf16.msra.mxu0 %v292
    %315 = vmatprep.subr.bf16.mxu0 0
    %316 = vmatpush1.bf16.msra.mxu0 %v293
    %317 = vmatprep.subr.bf16.mxu0 0
    %318 = vmatpush1.bf16.msra.mxu0 %v294
    %319 = vmatprep.subr.bf16.mxu0 0
    %320 = vmatpush1.bf16.msra.mxu0 0
    %321 = vmatprep.subr.bf16.mxu0 0
    %322 = vmatpush1.bf16.msra.mxu0 0
    %323 = vmatprep.subr.bf16.mxu0 0
    %324 = vmatpush1.bf16.msra.mxu0 0
    %325 = vmatprep.subr.bf16.mxu0 0
    %326 = vmatpush1.bf16.msra.mxu0 0
    %327 = vmatprep.subr.bf16.mxu0 0
    %328 = vmatpush1.bf16.msra.mxu0 0
    %329 = vmatprep.subr.bf16.mxu0 0
    %330 = vmatpush1.bf16.msra.mxu0 0
    %331 = vmatprep.subr.bf16.mxu0 0
    %332 = vmatpush1.bf16.msra.mxu0 0
    %333 = vmatprep.subr.bf16.mxu0 0
    %334 = vmatpush1.bf16.msra.mxu0 0
    %335 = vmatprep.mubr.bf16.mxu0 0
    %336 = vmatmul.mubr.bf16.gmra.mrb[0].mxu0 %v231
    %v337 = vpop.f32.mrb[0].mxu0
    %v338 = vadd.f32 %v253, %v337
    %v339 = vpop.f32.mrb[0].mxu0
    %v340 = vpop.f32.mrb[0].mxu0
    %v341 = vadd.f32 %v253, %v340
    %v342 = vpop.f32.mrb[0].mxu0
    %343 = vdwg.mxu0
    %v344 = vmax.f32 %v338, 0.0
    %v345 = vmax.f32 %v341, 0.0
    %v346 = vpack.c.bf16 %v345, %v344
    %v347 = vld [vmem:[#allocation6] sm:$0xf]
    %v348 = vld [vmem:[#allocation6 + $0x4] sm:$0xf]
    %v349 = vld [vmem:[#allocation6 + $0x8] sm:$0xf]
    %v350 = vld [vmem:[#allocation6 + $0xc] sm:$0xf]
    %v351 = vld [vmem:[#allocation6 + $0x10] sm:$0xf]
    %v352 = vld [vmem:[#allocation6 + $0x14] sm:$0xf]
    %v353 = vld [vmem:[#allocation6 + $0x18] sm:$0xf]
    %v354 = vld [vmem:[#allocation6 + $0x1c] sm:$0xf]
    %v355 = vld [vmem:[#allocation6 + $0x20] sm:$0xf]
    %v356 = vld [vmem:[#allocation6 + $0x24] sm:$0xf]
    %v357 = vld [vmem:[#allocation6 + $0x28] sm:$0xf]
    %v358 = vld [vmem:[#allocation6 + $0x2c] sm:$0xf]
    %v359 = vld [vmem:[#allocation6 + $0x30] sm:$0xf]
    %v360 = vld [vmem:[#allocation6 + $0x34] sm:$0xf]
    %v361 = vld [vmem:[#allocation6 + $0x38] sm:$0xf]
    %v362 = vld [vmem:[#allocation6 + $0x3c] sm:$0xf]
    %v363 = vld [vmem:[%s6] sm:$0x1]
    %v365 = vlaneseq
    %v366 = vshrl.u32 %v365, 7
    %v367 = vsub.s32 0, %v366
    %v368 = vrot.slane %v363, %v367
    %v386 = vunpack.c.l.b16 %v347
    %v387 = vunpack.c.l.b16 %v348
    %v388 = vunpack.c.l.b16 %v349
    %v389 = vunpack.c.l.b16 %v350
    %v390 = vunpack.c.l.b16 %v351
    %v391 = vunpack.c.l.b16 %v352
    %v392 = vunpack.c.l.b16 %v353
    %v393 = vunpack.c.l.b16 %v354
    %v394 = vunpack.c.l.b16 %v355
    %v395 = vunpack.c.l.b16 %v356
    %v396 = vunpack.c.l.b16 %v357
    %v397 = vunpack.c.l.b16 %v358
    %v398 = vunpack.c.l.b16 %v359
    %v399 = vunpack.c.l.b16 %v360
    %v400 = vunpack.c.l.b16 %v361
    %v401 = vunpack.c.l.b16 %v362
    %v402 = vpack.c.b16 %v387, %v386
    %v403 = vpack.c.b16 %v389, %v388
    %v404 = vpack.c.b16 %v391, %v390
    %v405 = vpack.c.b16 %v393, %v392
    %v406 = vpack.c.b16 %v395, %v394
    %v407 = vpack.c.b16 %v397, %v396
    %v408 = vpack.c.b16 %v399, %v398
    %v409 = vpack.c.b16 %v401, %v400
    %418 = vmatprep.subr.bf16.mxu0 0
    %419 = vmatpush1.bf16.msra.mxu0 %v402
    %420 = vmatprep.subr.bf16.mxu0 0
    %421 = vmatpush1.bf16.msra.mxu0 %v403
    %422 = vmatprep.subr.bf16.mxu0 0
    %423 = vmatpush1.bf16.msra.mxu0 %v404
    %424 = vmatprep.subr.bf16.mxu0 0
    %425 = vmatpush1.bf16.msra.mxu0 %v405
    %426 = vmatprep.subr.bf16.mxu0 0
    %427 = vmatpush1.bf16.msra.mxu0 %v406
    %428 = vmatprep.subr.bf16.mxu0 0
    %429 = vmatpush1.bf16.msra.mxu0 %v407
    %430 = vmatprep.subr.bf16.mxu0 0
    %431 = vmatpush1.bf16.msra.mxu0 %v408
    %432 = vmatprep.subr.bf16.mxu0 0
    %433 = vmatpush1.bf16.msra.mxu0 %v409
    %434 = vmatprep.subr.bf16.mxu0 0
    %435 = vmatpush1.bf16.msra.mxu0 0
    %436 = vmatprep.subr.bf16.mxu0 0
    %437 = vmatpush1.bf16.msra.mxu0 0
    %438 = vmatprep.subr.bf16.mxu0 0
    %439 = vmatpush1.bf16.msra.mxu0 0
    %440 = vmatprep.subr.bf16.mxu0 0
    %441 = vmatpush1.bf16.msra.mxu0 0
    %442 = vmatprep.subr.bf16.mxu0 0
    %443 = vmatpush1.bf16.msra.mxu0 0
    %444 = vmatprep.subr.bf16.mxu0 0
    %445 = vmatpush1.bf16.msra.mxu0 0
    %446 = vmatprep.subr.bf16.mxu0 0
    %447 = vmatpush1.bf16.msra.mxu0 0
    %448 = vmatprep.subr.bf16.mxu0 0
    %449 = vmatpush1.bf16.msra.mxu0 0
    %450 = vmatprep.mubr.bf16.mxu0 0
    %451 = vmatmul.mubr.bf16.gmra.mrb[0].mxu0 %v346
    %v452 = vpop.f32.mrb[0].mxu0
    %v453 = vadd.f32 %v368, %v452
    %v454 = vpop.f32.mrb[0].mxu0
    %v455 = vpop.f32.mrb[0].mxu0
    %v456 = vadd.f32 %v368, %v455
    %v457 = vpop.f32.mrb[0].mxu0
    %458 = vdwg.mxu0
    %v459 = vmax.f32 %v453, 0.0
    %v460 = vmax.f32 %v456, 0.0
    %v461 = vadd.f32 %v459, %v228
    %v462 = vadd.f32 %v460, %v230
    %v463 = vpack.c.bf16 %v462, %v461
    %v465 = vunpack.c.l.b16 %v463
    %v466 = vunpack.c.h.b16 %v463
    %v467 = vpack.c.b16 %v465, %v465
    %v468 = vpack.c.b16 %v466, %v466
    %471 = vst [vmem:[%s7] sm:$0xf] %v467
    %472 = vst [vmem:[%s7 + $0x4] sm:$0xf] %v468
    // Predicated region
    $region42: #{resnet_block.1} parent=1 // pred_check
      _
    $region43: #{resnet_block.1} parent=1 // pred_check_branch
      %474 = sbr.rel (0) target = $region45
    $region44: #{resnet_block.1} parent=1 // pred_region
      _
    $region45: #{resnet_block.1} parent=1 // pred_fallthru
      _
    // Predicated region
    $region46: #{resnet_block.1} parent=1 // pred_check
      _
    $region47: #{resnet_block.1} parent=1 // pred_check_branch
      %476 = sbr.rel (0) target = $region49
    $region48: #{resnet_block.1} parent=1 // pred_region
      _
    $region49: #{resnet_block.1} parent=1 // pred_fallthru
      _
    %477 = vsyncpa [#allocation3], 1
    %478 = vsyncpa [#allocation5], 1

</llo_original>
